<compile_context>
chip_gen: v5e
topology: v5e:2x2
jax: 0.10.0
libtpu: 0.0.40
codegen_flags: <defaults>
</compile_context>

<pallas_src>
import functools

import jax
import jax.numpy as jnp
import numpy as np
from jax.experimental import pallas as pl
from jax.experimental.pallas import tpu as pltpu

NET, DEV, PIN = 0, 1, 2

HID_DIM = 32
NODE_EMBED_DIM = HID_DIM // 2      # use_stats=True -> hidden_dim // 2
ATTR_DIM = 17
# packed node features: [onehot(node_type,4) | attr(17) | onehot(pin,17) | 1]
FEAT_DIM = 4 + ATTR_DIM + ATTR_DIM + 1     # 39


def _round_up(x, m):
  return ((x + m - 1) // m) * m


def _vmem_limit(nbytes):
  """Scoped-VMEM limit sized from the actual buffers (+margin), capped at the
  smallest physical per-core VMEM across v5e/v6e/v7x (64 MiB)."""
  return int(min(64 * 1024 * 1024, 2 * nbytes + 4 * 1024 * 1024))


# ---------------------------------------------------------------------------
# Kernels
# ---------------------------------------------------------------------------
def _encode_kernel(nf_ref, enc_w_ref, w_g1_ref, xw_ref, *, node_dim):
  """Fused node/net/dev/pin encoders + first GCN input transform (x @ Wg1)."""
  f32 = jnp.float32
  nd = node_dim
  nf = nf_ref[...]                                              # (tm, 39)
  # single block-diagonal encoder matmul:
  #   cols [0:nd)=net linear, [nd:2nd)=dev linear, [2nd:3nd)=pin emb,
  #   [3nd:4nd)=node-type embedding (biases via the constant-1 column).
  enc = jnp.dot(nf, enc_w_ref[...], preferred_element_type=f32)  # (tm, 4*nd)
  lin_net = enc[:, 0 * nd:1 * nd]
  lin_dev = enc[:, 1 * nd:2 * nd]
  emb_pin = enc[:, 2 * nd:3 * nd]
  x_node = enc[:, 3 * nd:4 * nd]
  # per-row encoder select = multiply by the node-type one-hot columns (VPU).
  attr_emb = (nf[:, 0:1] * lin_net + nf[:, 1:2] * lin_dev + nf[:, 2:3] * emb_pin)
  # split-weight form of [x_node | attr_emb] @ Wg1 (no lane-axis concat).
  w_g1 = w_g1_ref[...]
  xw = (jnp.dot(x_node, w_g1[:nd, :], preferred_element_type=f32)
        + jnp.dot(attr_emb, w_g1[nd:, :], preferred_element_type=f32))
  xw_ref[...] = xw.astype(xw_ref.dtype)


def _gcn1_kernel(a_ref, xw_ref, w_g2_ref, b_g1_ref, hw_ref):
  """Layer-1 propagation for one A_hat row tile + layer-2 input transform."""
  f32 = jnp.float32
  h1 = jnp.dot(a_ref[...], xw_ref[...], preferred_element_type=f32) + b_g1_ref[...]
  h1 = jnp.maximum(h1, 0.0)
  hw = jnp.dot(h1.astype(w_g2_ref.dtype), w_g2_ref[...],
               preferred_element_type=f32)
  hw_ref[...] = hw.astype(hw_ref.dtype)


def _head_kernel(a_sd_ref, hw_ref, w_h1_ref, hc_ref, pred_ref, *, b_pad):
  """Layer-2 propagation restricted to the 2B src/dst rows + 2-layer MLP head.

  Assumes (dataloader contract of the reference implementation) that labeled
  src nodes occupy graph rows [0,B) and dst nodes rows [B,2B); the wrapper
  packs those A_hat rows into a_sd = [src rows padded to B_pad | dst rows
  padded to B_pad] so both in-kernel slices are sublane aligned.
  """
  f32 = jnp.float32
  h = hw_ref.shape[1]
  hc = hc_ref[...]                                   # (4, H) packed consts
  sd = jnp.dot(a_sd_ref[...], hw_ref[...], preferred_element_type=f32) + hc[0:1, :]
  sd = jnp.maximum(sd, 0.0)                          # (2*B_pad, H)
  src = sd[:b_pad, :]
  dst = sd[b_pad:, :]
  # split-weight form of [src | dst] @ Wh1 (no lane-axis concat).
  w_h1 = w_h1_ref[...]
  z = (jnp.dot(src, w_h1[:h, :], preferred_element_type=f32)
       + jnp.dot(dst, w_h1[h:, :], preferred_element_type=f32)
       + hc[1:2, :])
  z = jnp.maximum(z, 0.0)
  # final 32->1 linear as a VPU multiply + lane reduce.
  # TODO(synk): for production batch sizes write pred lane-dense ((1, B_pad)
  # with B on the lane axis) instead of a last-dim-1 column store.
  pred_ref[...] = jnp.sum(z * hc[2:3, :], axis=1, keepdims=True) + hc[3:4, 0:1]


# ---------------------------------------------------------------------------
# Parameters & packing
# ---------------------------------------------------------------------------
def init_params(key, hid_dim=HID_DIM, node_dim=NODE_EMBED_DIM):
  ks = jax.random.split(key, 15)
  s = 0.1
  shapes = {
      'node_emb': (4, node_dim), 'edge_emb': (4, hid_dim),   # edge_emb is dead on the gcn path
      'w_net': (ATTR_DIM, node_dim), 'b_net': (1, node_dim),
      'w_dev': (ATTR_DIM, node_dim), 'b_dev': (1, node_dim),
      'pin_emb': (ATTR_DIM, node_dim),
      'w_g1': (hid_dim, hid_dim), 'b_g1': (1, hid_dim),
      'w_g2': (hid_dim, hid_dim), 'b_g2': (1, hid_dim),
      'w_h1': (2 * hid_dim, hid_dim), 'b_h1': (1, hid_dim),
      'w_h2': (hid_dim, 1), 'b_h2': (1, 1),
  }
  return {name: s * jax.random.normal(k, shp, jnp.float32)
          for (name, shp), k in zip(shapes.items(), ks)}


def pack_encoder_weights(p, node_dim=NODE_EMBED_DIM):
  """Block-diagonal weight slab for the fused (N,39)@(39,4*Dn) encoder matmul."""
  nd = node_dim
  w = jnp.zeros((FEAT_DIM, 4 * nd), jnp.float32)
  w = w.at[0:4, 3 * nd:4 * nd].set(p['node_emb'])                       # node-type emb
  w = w.at[4:4 + ATTR_DIM, 0:nd].set(p['w_net'])                        # net linear
  w = w.at[4:4 + ATTR_DIM, nd:2 * nd].set(p['w_dev'])                   # dev linear
  w = w.at[4 + ATTR_DIM:4 + 2 * ATTR_DIM, 2 * nd:3 * nd].set(p['pin_emb'])  # pin emb
  w = w.at[FEAT_DIM - 1, 0:nd].set(p['b_net'][0])                       # biases via 1-col
  w = w.at[FEAT_DIM - 1, nd:2 * nd].set(p['b_dev'][0])
  return w


def pack_head_consts(p, hid_dim=HID_DIM):
  hc = jnp.zeros((4, hid_dim), jnp.float32)
  hc = hc.at[0].set(p['b_g2'][0])
  hc = hc.at[1].set(p['b_h1'][0])
  hc = hc.at[2].set(p['w_h2'][:, 0])
  hc = hc.at[3, 0].set(p['b_h2'][0, 0])
  return hc


def gcn_norm_adj(edge_index, num_nodes):
  # glue: dense D^{-1/2}(A+I)D^{-1/2}, equivalent to PyG GCNConv propagation.
  # TODO(synk): production-scale circuit graphs (O(N) edges) need a sparse CSR
  # SpMM formulation with scalar-prefetched row offsets instead of dense A_hat.
  src, dst = edge_index[0], edge_index[1]
  a = jnp.zeros((num_nodes, num_nodes), jnp.float32).at[dst, src].add(1.0)
  a = a + jnp.eye(num_nodes, dtype=jnp.float32)          # add_self_loops
  deg = a.sum(axis=1)
  dinv = jnp.where(deg > 0, jax.lax.rsqrt(deg), 0.0)
  return dinv[:, None] * a * dinv[None, :]


# ---------------------------------------------------------------------------
# Forward
# ---------------------------------------------------------------------------
def graph_head_forward(params, node_type, node_attr, edge_index, edge_type,
                       edge_label, *, row_tile=512):
  del edge_type  # edge_encoder output is never consumed on the model='gcn' path
  f32, bf16 = jnp.float32, jnp.bfloat16
  h, nd = HID_DIM, NODE_EMBED_DIM
  n = node_type.shape[0]
  b = edge_label.shape[0]

  # --- tiling geometry (row tile multiple of 16 for the bf16 activations) ---
  tm = _round_up(min(row_tile, n), 16)
  n_pad = _round_up(n, tm)
  b_pad = _round_up(b, 8)                      # sublane-align src/dst slabs
  grid = (n_pad // tm,)

  # --- dense normalized adjacency, stored bf16 (dominant HBM traffic) -------
  a_hat = gcn_norm_adj(edge_index, n)
  a_hat = jnp.pad(a_hat, ((0, n_pad - n), (0, n_pad - n))).astype(bf16)

  # src rows [0,B) and dst rows [B,2B) of A_hat (dataloader-ordering contract),
  # padded separately to B_pad rows so the in-kernel slices are 8-row aligned.
  a_sd = jnp.zeros((2 * b_pad, n_pad), bf16)
  a_sd = a_sd.at[:b].set(a_hat[:b])
  a_sd = a_sd.at[b_pad:b_pad + b].set(a_hat[b:2 * b])

  # --- packed node features: [onehot(type,4) | attr | onehot(pin,17) | 1] ---
  oh_t = jax.nn.one_hot(node_type.astype(jnp.int32), 4, dtype=f32)
  pin_idx = node_attr[:, 0].astype(jnp.int32)      # matches .long() truncation
  oh_p = jax.nn.one_hot(pin_idx, ATTR_DIM, dtype=f32)
  node_feat = jnp.concatenate(
      [oh_t, node_attr.astype(f32), oh_p, jnp.ones((n, 1), f32)], axis=1)
  node_feat = jnp.pad(node_feat, ((0, n_pad - n), (0, 0)))

  enc_w = pack_encoder_weights(params)             # (39, 4*Dn)
  head_consts = pack_head_consts(params)           # (4, H)
  w_g1 = params['w_g1'].astype(f32)
  w_g2 = params['w_g2'].astype(bf16)
  b_g1 = params['b_g1'].astype(f32)
  w_h1 = params['w_h1'].astype(f32)

  vmem = pltpu.MemorySpace.VMEM

  # ---- kernel 1: fused encoders + x @ Wg1 (row-parallel) -------------------
  vmem1 = _vmem_limit(2 * tm * FEAT_DIM * 4 + FEAT_DIM * 4 * nd * 4
                      + h * h * 4 + 2 * tm * h * 2)
  xw = pl.pallas_call(
      functools.partial(_encode_kernel, node_dim=nd),
      out_shape=jax.ShapeDtypeStruct((n_pad, h), bf16),
      grid=grid,
      in_specs=[pl.BlockSpec((tm, FEAT_DIM), lambda i: (i, 0)),
                pl.BlockSpec((FEAT_DIM, 4 * nd), lambda i: (0, 0)),
                pl.BlockSpec((h, h), lambda i: (0, 0))],
      out_specs=pl.BlockSpec((tm, h), lambda i: (i, 0)),
      compiler_params=pltpu.CompilerParams(
          dimension_semantics=("parallel",), vmem_limit_bytes=vmem1),
  )(node_feat, enc_w, w_g1)

  # ---- kernel 2: GCN layer-1 propagation (streams A_hat row tiles) ---------
  vmem2 = _vmem_limit(2 * tm * n_pad * 2 + 2 * n_pad * h * 2
                      + h * h * 2 + h * 4 + 2 * tm * h * 2)
  cost2 = pl.CostEstimate(
      flops=2 * n_pad * n_pad * h + 2 * n_pad * h * h,
      transcendentals=0,
      bytes_accessed=n_pad * n_pad * 2 + 4 * n_pad * h * 2 + h * h * 2)
  hw = pl.pallas_call(
      _gcn1_kernel,
      out_shape=jax.ShapeDtypeStruct((n_pad, h), bf16),
      grid=grid,
      in_specs=[pl.BlockSpec((tm, n_pad), lambda i: (i, 0)),   # A_hat row tile
                pl.BlockSpec((n_pad, h), lambda i: (0, 0)),    # xw, VMEM-resident
                pl.BlockSpec((h, h), lambda i: (0, 0)),        # Wg2
                pl.BlockSpec((1, h), lambda i: (0, 0))],       # b_g1
      out_specs=pl.BlockSpec((tm, h), lambda i: (i, 0)),
      compiler_params=pltpu.CompilerParams(
          dimension_semantics=("parallel",), vmem_limit_bytes=vmem2),
      cost_estimate=cost2,
  )(a_hat, xw, w_g2, b_g1)

  # ---- kernel 3: layer-2 propagation for the 2B head rows + MLP head -------
  vmem3 = _vmem_limit(2 * b_pad * n_pad * 2 + n_pad * h * 2
                      + 2 * h * h * 4 + 4 * h * 4 + b_pad * 4)
  cost3 = pl.CostEstimate(
      flops=2 * (2 * b_pad) * n_pad * h + 2 * b_pad * (2 * h) * h + 2 * b_pad * h,
      transcendentals=0,
      bytes_accessed=2 * b_pad * n_pad * 2 + n_pad * h * 2 + 2 * h * h * 4)
  pred_pad = pl.pallas_call(
      functools.partial(_head_kernel, b_pad=b_pad),
      out_shape=jax.ShapeDtypeStruct((b_pad, 1), f32),
      in_specs=[pl.BlockSpec(memory_space=vmem)] * 4,
      out_specs=pl.BlockSpec(memory_space=vmem),
      compiler_params=pltpu.CompilerParams(vmem_limit_bytes=vmem3),
      cost_estimate=cost3,
  )(a_sd, hw, w_h1, head_consts)

  pred = pred_pad[:b]
  true_class = edge_label[:, 1].astype(jnp.int32)
  true_label = edge_label
  return pred, true_class, true_label


# ---------------------------------------------------------------------------
# Pure-JAX reference (f32, highest precision) mirroring the PyTorch forward
# ---------------------------------------------------------------------------
def ref_forward(params, node_type, node_attr, edge_index, edge_type, edge_label):
  del edge_type
  with jax.default_matmul_precision("highest"):
    n = node_type.shape[0]
    b = edge_label.shape[0]
    a_hat = gcn_norm_adj(edge_index, n)
    x_node = params['node_emb'][node_type]
    lin_net = node_attr @ params['w_net'] + params['b_net']
    lin_dev = node_attr @ params['w_dev'] + params['b_dev']
    emb_pin = params['pin_emb'][node_attr[:, 0].astype(jnp.int32)]
    nt = node_type[:, None]
    attr_emb = jnp.where(nt == NET, lin_net,
               jnp.where(nt == DEV, lin_dev,
               jnp.where(nt == PIN, emb_pin, 0.0)))
    x = jnp.concatenate([x_node, attr_emb], axis=1)
    h = jnp.maximum(a_hat @ (x @ params['w_g1']) + params['b_g1'], 0.0)
    h = jnp.maximum(a_hat @ (h @ params['w_g2']) + params['b_g2'], 0.0)
    g = jnp.concatenate([h[:b], h[b:2 * b]], axis=1)
    z = jnp.maximum(g @ params['w_h1'] + params['b_h1'], 0.0)
    pred = z @ params['w_h2'] + params['b_h2']
  return pred, edge_label[:, 1].astype(jnp.int32), edge_label


if __name__ == "__main__":
  key = jax.random.PRNGKey(0)
  kp, k1, k2, k3, k4, k5 = jax.random.split(key, 6)
  N, B = 32, 4
  params = init_params(kp)

  node_type = jax.random.randint(k1, (N,), 0, 4, jnp.int32)
  node_attr = jax.random.normal(k2, (N, ATTR_DIM), jnp.float32)
  node_attr = node_attr.at[:, 0].set(
      jax.random.randint(k3, (N,), 0, ATTR_DIM, jnp.int32).astype(jnp.float32))

  # ring graph on N nodes, both directions (undirected)
  idx = jnp.arange(N, dtype=jnp.int32)
  src = jnp.concatenate([idx, (idx + 1) % N])
  dst = jnp.concatenate([(idx + 1) % N, idx])
  edge_index = jnp.stack([src, dst])                    # (2, 64)
  E = edge_index.shape[1]
  edge_type = jax.random.randint(k4, (E,), 0, 4, jnp.int32)
  edge_label = jax.random.randint(k5, (B, 2), 0, 4, jnp.int32).astype(jnp.float32)

  # row_tile=16 keeps the toy graph multi-step so the row grid is exercised.
  pred, true_class, true_label = graph_head_forward(
      params, node_type, node_attr, edge_index, edge_type, edge_label,
      row_tile=16)
  jax.block_until_ready((pred, true_class, true_label))

  ref_pred, ref_class, ref_label = ref_forward(
      params, node_type, node_attr, edge_index, edge_type, edge_label)

  assert pred.shape == (B, 1)
  # bf16 A_hat / activations vs the f32 "highest"-precision reference.
  np.testing.assert_allclose(np.asarray(pred), np.asarray(ref_pred),
                             atol=1e-2, rtol=5e-2)
  np.testing.assert_array_equal(np.asarray(true_class), np.asarray(ref_class))
  np.testing.assert_allclose(np.asarray(true_label), np.asarray(ref_label))
  print("KERNEL_OK")
</pallas_src>

<mosaic_0001>
module attributes {stable_mosaic.version = 11 : i64} {
  func.func @_encode_kernel(%arg0: i32, %arg1: memref<16x39xf32, #tpu.memory_space<vmem>>, %arg2: memref<39x64xf32, #tpu.memory_space<vmem>>, %arg3: memref<32x32xf32, #tpu.memory_space<vmem>>, %arg4: memref<16x32xbf16, #tpu.memory_space<vmem>>) attributes {dimension_semantics = [#tpu.dimension_semantics<parallel>], iteration_bounds = array<i64: 2>, scalar_prefetch = 0 : i64, scratch_operands = 0 : i64, tpu.core_type = #tpu.core_type<tc>, window_params = [{transform_indices = @transform_0, window_bounds = array<i64: 16, 39>}, {pipeline_mode = #tpu.pipeline_mode<synchronous>, transform_indices = @transform_1, window_bounds = array<i64: 39, 64>}, {pipeline_mode = #tpu.pipeline_mode<synchronous>, transform_indices = @transform_2, window_bounds = array<i64: 32, 32>}, {transform_indices = @transform_3, window_bounds = array<i64: 16, 32>}]} {
    %c0 = arith.constant 0 : index
    %c0_0 = arith.constant 0 : index
    %0 = vector.load %arg1[%c0, %c0_0] : memref<16x39xf32, #tpu.memory_space<vmem>>, vector<16x39xf32>
    %c0_1 = arith.constant 0 : index
    %c0_2 = arith.constant 0 : index
    %1 = vector.load %arg2[%c0_1, %c0_2] : memref<39x64xf32, #tpu.memory_space<vmem>>, vector<39x64xf32>
    %cst = arith.constant dense<0.000000e+00> : vector<16x64xf32>
    %2 = tpu.matmul %0, %1, %cst {dimension_numbers = #tpu.dot_dimension_numbers<[1], [0], [0], [1], [0, 0, 1, 1], [], []>} : vector<16x39xf32>, vector<39x64xf32>, vector<16x64xf32> -> vector<16x64xf32>
    %3 = vector.extract_strided_slice %2 {offsets = [0, 0], sizes = [16, 16], strides = [1, 1]} : vector<16x64xf32> to vector<16x16xf32>
    %4 = vector.extract_strided_slice %2 {offsets = [0, 16], sizes = [16, 16], strides = [1, 1]} : vector<16x64xf32> to vector<16x16xf32>
    %5 = vector.extract_strided_slice %2 {offsets = [0, 32], sizes = [16, 16], strides = [1, 1]} : vector<16x64xf32> to vector<16x16xf32>
    %6 = vector.extract_strided_slice %2 {offsets = [0, 48], sizes = [16, 16], strides = [1, 1]} : vector<16x64xf32> to vector<16x16xf32>
    %7 = vector.extract_strided_slice %0 {offsets = [0, 0], sizes = [16, 1], strides = [1, 1]} : vector<16x39xf32> to vector<16x1xf32>
    %8 = vector.broadcast %7 : vector<16x1xf32> to vector<16x16xf32>
    %9 = arith.mulf %8, %3 : vector<16x16xf32>
    %10 = vector.extract_strided_slice %0 {offsets = [0, 1], sizes = [16, 1], strides = [1, 1]} : vector<16x39xf32> to vector<16x1xf32>
    %11 = vector.broadcast %10 : vector<16x1xf32> to vector<16x16xf32>
    %12 = arith.mulf %11, %4 : vector<16x16xf32>
    %13 = arith.addf %9, %12 : vector<16x16xf32>
    %14 = vector.extract_strided_slice %0 {offsets = [0, 2], sizes = [16, 1], strides = [1, 1]} : vector<16x39xf32> to vector<16x1xf32>
    %15 = vector.broadcast %14 : vector<16x1xf32> to vector<16x16xf32>
    %16 = arith.mulf %15, %5 : vector<16x16xf32>
    %17 = arith.addf %13, %16 : vector<16x16xf32>
    %c0_3 = arith.constant 0 : index
    %c0_4 = arith.constant 0 : index
    %18 = vector.load %arg3[%c0_3, %c0_4] : memref<32x32xf32, #tpu.memory_space<vmem>>, vector<32x32xf32>
    %19 = vector.extract_strided_slice %18 {offsets = [0, 0], sizes = [16, 32], strides = [1, 1]} : vector<32x32xf32> to vector<16x32xf32>
    %cst_5 = arith.constant dense<0.000000e+00> : vector<16x32xf32>
    %20 = tpu.matmul %6, %19, %cst_5 {dimension_numbers = #tpu.dot_dimension_numbers<[1], [0], [0], [1], [0, 0, 1, 1], [], []>} : vector<16x16xf32>, vector<16x32xf32>, vector<16x32xf32> -> vector<16x32xf32>
    %21 = vector.extract_strided_slice %18 {offsets = [16, 0], sizes = [16, 32], strides = [1, 1]} : vector<32x32xf32> to vector<16x32xf32>
    %cst_6 = arith.constant dense<0.000000e+00> : vector<16x32xf32>
    %22 = tpu.matmul %17, %21, %cst_6 {dimension_numbers = #tpu.dot_dimension_numbers<[1], [0], [0], [1], [0, 0, 1, 1], [], []>} : vector<16x16xf32>, vector<16x32xf32>, vector<16x32xf32> -> vector<16x32xf32>
    %23 = arith.addf %20, %22 : vector<16x32xf32>
    %24 = arith.truncf %23 : vector<16x32xf32> to vector<16x32xbf16>
    %c0_7 = arith.constant 0 : index
    %c0_8 = arith.constant 0 : index
    %25 = vector.load %arg4[%c0_7, %c0_8] : memref<16x32xbf16, #tpu.memory_space<vmem>>, vector<16x32xbf16>
    tpu.vector_store %arg4[%c0_7, %c0_8], %24 {strides = array<i32>} : memref<16x32xbf16, #tpu.memory_space<vmem>>, vector<16x32xbf16>,
    return
  }
  func.func @transform_0(%arg0: i32) -> (i32, i32) {
    %c0_i32 = arith.constant 0 : i32
    %c0_i32_0 = arith.constant 0 : i32
    return %arg0, %c0_i32 : i32, i32
  }
  func.func @transform_1(%arg0: i32) -> (i32, i32) {
    %c0_i32 = arith.constant 0 : i32
    %c0_i32_0 = arith.constant 0 : i32
    %c0_i32_1 = arith.constant 0 : i32
    return %c0_i32, %c0_i32_0 : i32, i32
  }
  func.func @transform_2(%arg0: i32) -> (i32, i32) {
    %c0_i32 = arith.constant 0 : i32
    %c0_i32_0 = arith.constant 0 : i32
    %c0_i32_1 = arith.constant 0 : i32
    return %c0_i32, %c0_i32_0 : i32, i32
  }
  func.func @transform_3(%arg0: i32) -> (i32, i32) {
    %c0_i32 = arith.constant 0 : i32
    %c0_i32_0 = arith.constant 0 : i32
    return %arg0, %c0_i32 : i32, i32
  }
}

</mosaic_0001>

<llo_original>
// kernel: tpu_custom_call.1
$region0: #{tpu_custom_call.1}
  #allocation0 [shape = 'u32[]', space=smem, size = 0x4, offset = 0x4, fixed_abs, tag = 'smem constant byte address 0x4 - core index']
  #allocation1 [shape = 'u32[72,128]{1,0:T(1,128)}', space=vmem, size = 0x9000, scoped, tag = 'internal scratch']
  %s0 = inlined_call_operand.hbm [shape: f32[32,39], index: 0, kind: input, shape index: {}]
  %s1 = inlined_call_operand.hbm [shape: f32[39,64], index: 1, kind: input, shape index: {}]
  %s2 = inlined_call_operand.hbm [shape: f32[32,32], index: 2, kind: input, shape index: {}]
  %s3 = inlined_call_operand.hbm [shape: bf16[32,32], index: 3, kind: output, shape index: {}]
  %s4 = sld [smem:[#allocation0]]
  $region57: #{tpu_custom_call.1} parent=0
    _
  %s6 = ssub.s32 1, %s4
  %s7 = scalar_select 0, %s6, %s4
  $region1: #{tpu_custom_call.1} parent=0
    #allocation2 [shape = 'u8[16384]{0}', space=vmem, size = 0x4000, scoped, tag = 'input window, operand 0']
    #allocation3 [shape = 's32[2]{0}', space=sflag, size = 0x8, scoped, tag = 'scoped memory for tpu_custom_call.1']
    #allocation4 [shape = 's32[2]{0}', space=sflag, size = 0x8, scoped, tag = 'scoped memory for tpu_custom_call.1']
    #allocation5 [shape = 'u8[20480]{0}', space=vmem, size = 0x5000, scoped, tag = 'input window, operand 1, single buffered']
    #allocation6 [shape = 's32[1]{0}', space=sflag, size = 0x4, scoped, tag = 'scoped memory for tpu_custom_call.1']
    #allocation7 [shape = 'u8[16384]{0}', space=vmem, size = 0x4000, scoped, tag = 'input window, operand 2, single buffered']
    #allocation8 [shape = 'u8[8192]{0}', space=vmem, size = 0x2000, scoped, tag = 'output window, operand 0']
    %8 = vsyncpa [#allocation3], 0
    %s9 = scalar_lea.sflag [#allocation3], 1
    %10 = vsyncpa %s9, 0
    %11 = vsyncpa [#allocation6], 0
    %12 = vsyncpa [#allocation4], 0
    %s13 = scalar_lea.sflag [#allocation4], 1
    %14 = vsyncpa %s13, 0
    loop: start=0, step=1, limit=4
    $region2: #{tpu_custom_call.1} parent=1 // loop_pre_header
      _
    $region3: #{tpu_custom_call.1} parent=1 // loop_header
      %s16 = sphi 0, %s20
      %p17 = scmp.ge.s32.totalorder %s16, 4
      %s26 = sphi 0, %s28
      %s29 = sphi 0, %s26
      %s30 = sphi 0, %s29
      %s46 = sphi 0, %s30
      %s50 = sphi 0, %s50
      %s52 = sphi 0, %s50
      %s53 = sphi 0, %s52
      %s67 = sphi 0, %s53
      %s71 = sphi 0, %s71
      %s73 = sphi 0, %s71
      %s74 = sphi 0, %s73
      %s88 = sphi 0, %s74
      %s94 = sphi 0, %s96
      %s97 = sphi 0, %s94
      %s98 = sphi 0, %s97
      %s114 = sphi 0, %s98
    $region4: #{tpu_custom_call.1} parent=1 // loop_header_branch
      %19 = sbr.rel (%p17) target = $region8
    $region5: #{tpu_custom_call.1} parent=1 // loop_body
      %s21 = ssub.s32 %s16, 1
      %s22 = ssub.s32 %s16, 2
      %s23 = sadd.s32 %s16, 1
      %s24 = ssub.s32 %s16, %s23
      %p25 = scmp.eq.s32.totalorder %s24, 0
      %s27 = sadd.s32 %s26, 1
      %s28 = scalar_select %p25, %s26, %s27
      %p31 = pneg %p25
      %p32 = scmp.eq.s32.totalorder %s16, 1
      %p33 = por %p31, %p32
      %p34 = scmp.ne.s32.totalorder %s26, %s29
      %p35 = scmp.eq.s32.totalorder %s16, 0
      %p36 = por %p34, %p35
      %p37 = scmp.ne.s32.totalorder %s26, %s29
      %p38 = scmp.eq.s32.totalorder %s21, 1
      %p39 = por %p37, %p38
      %p40 = scmp.ne.s32.totalorder %s29, %s30
      %p41 = scmp.eq.s32.totalorder %s21, 0
      %p42 = por %p40, %p41
      %p43 = scmp.ne.s32.totalorder %s29, %s30
      %p44 = scmp.eq.s32.totalorder %s22, 1
      %p45 = por %p43, %p44
      %p47 = scmp.ne.s32.totalorder %s30, %s46
      %p48 = scmp.eq.s32.totalorder %s22, 0
      %p49 = por %p47, %p48
      %s51 = sadd.s32 %s50, 1
      %p54 = scmp.eq.s32.totalorder %s16, 1
      %p55 = scmp.ne.s32.totalorder %s50, %s52
      %p56 = scmp.eq.s32.totalorder %s16, 0
      %p57 = por %p55, %p56
      %p58 = scmp.ne.s32.totalorder %s50, %s52
      %p59 = scmp.eq.s32.totalorder %s21, 1
      %p60 = por %p58, %p59
      %p61 = scmp.ne.s32.totalorder %s52, %s53
      %p62 = scmp.eq.s32.totalorder %s21, 0
      %p63 = por %p61, %p62
      %p64 = scmp.ne.s32.totalorder %s52, %s53
      %p65 = scmp.eq.s32.totalorder %s22, 1
      %p66 = por %p64, %p65
      %p68 = scmp.ne.s32.totalorder %s53, %s67
      %p69 = scmp.eq.s32.totalorder %s22, 0
      %p70 = por %p68, %p69
      %s72 = sadd.s32 %s71, 1
      %p75 = scmp.eq.s32.totalorder %s16, 1
      %p76 = scmp.ne.s32.totalorder %s71, %s73
      %p77 = scmp.eq.s32.totalorder %s16, 0
      %p78 = por %p76, %p77
      %p79 = scmp.ne.s32.totalorder %s71, %s73
      %p80 = scmp.eq.s32.totalorder %s21, 1
      %p81 = por %p79, %p80
      %p82 = scmp.ne.s32.totalorder %s73, %s74
      %p83 = scmp.eq.s32.totalorder %s21, 0
      %p84 = por %p82, %p83
      %p85 = scmp.ne.s32.totalorder %s73, %s74
      %p86 = scmp.eq.s32.totalorder %s22, 1
      %p87 = por %p85, %p86
      %p89 = scmp.ne.s32.totalorder %s74, %s88
      %p90 = scmp.eq.s32.totalorder %s22, 0
      %p91 = por %p89, %p90
      %s92 = ssub.s32 %s16, %s23
      %p93 = scmp.eq.s32.totalorder %s92, 0
      %s95 = sadd.s32 %s94, 1
      %s96 = scalar_select %p93, %s94, %s95
      %p99 = pneg %p93
      %p100 = scmp.eq.s32.totalorder %s16, 1
      %p101 = por %p99, %p100
      %p102 = scmp.ne.s32.totalorder %s94, %s97
      %p103 = scmp.eq.s32.totalorder %s16, 0
      %p104 = por %p102, %p103
      %p105 = scmp.ne.s32.totalorder %s94, %s97
      %p106 = scmp.eq.s32.totalorder %s21, 1
      %p107 = por %p105, %p106
      %p108 = scmp.ne.s32.totalorder %s97, %s98
      %p109 = scmp.eq.s32.totalorder %s21, 0
      %p110 = por %p108, %p109
      %p111 = scmp.ne.s32.totalorder %s97, %s98
      %p112 = scmp.eq.s32.totalorder %s22, 1
      %p113 = por %p111, %p112
      %p115 = scmp.ne.s32.totalorder %s98, %s114
      %p116 = scmp.eq.s32.totalorder %s22, 0
      %p117 = por %p115, %p116
      %p118 = scmp.le.s32.totalorder 1, %s16
      %p119 = scmp.lt.s32.totalorder %s16, 3
      %p120 = pnand %p118, %p119
      %p121 = pneg %p120
      // Predicated region
      $region9: #{tpu_custom_call.1} parent=5 // pred_check
        _
      $region10: #{tpu_custom_call.1} parent=5 // pred_check_branch
        %123 = sbr.rel (%p120) target = $region12
      $region11: #{tpu_custom_call.1} parent=5 // pred_region
        %s124 = ssub.s32 %s16, 1
        // Predicated region
        $region13: #{tpu_custom_call.1} parent=11 // pred_check
          %p125 = pneg %p63
        $region14: #{tpu_custom_call.1} parent=11 // pred_check_branch
          %127 = sbr.rel (%p125) target = $region16
        $region15: #{tpu_custom_call.1} parent=11 // pred_region
          %129 = vsyncadd [#allocation6], 0
          %s130 = sshll.u32 %s1, 4
          %s131 = int_to_ptr.hbm [resolvable:$true] %s130
          %s132 = sshll.u32 [#allocation5], 4
          %s133 = int_to_ptr.vmem [resolvable:$true] %s132
          %138 = dma.hbm_to_vmem [thread:$0]  %s131, 640, %s133, [#allocation6], 128, 128, 8
        $region16: #{tpu_custom_call.1} parent=11 // pred_fallthru
          _
        // Predicated region
        $region17: #{tpu_custom_call.1} parent=11 // pred_check
          %p139 = pneg %p84
        $region18: #{tpu_custom_call.1} parent=11 // pred_check_branch
          %141 = sbr.rel (%p139) target = $region20
        $region19: #{tpu_custom_call.1} parent=11 // pred_region
          %143 = vsyncadd [#allocation6], 0
          %s144 = sshll.u32 %s2, 4
          %s145 = int_to_ptr.hbm [resolvable:$true] %s144
          %s146 = sshll.u32 [#allocation7], 4
          %s147 = int_to_ptr.vmem [resolvable:$true] %s146
          %152 = dma.hbm_to_vmem [thread:$0]  %s145, 512, %s147, [#allocation6], 128, 128, 8
        $region20: #{tpu_custom_call.1} parent=11 // pred_fallthru
          _
      $region12: #{tpu_custom_call.1} parent=5 // pred_fallthru
        _
      %p153 = scmp.lt.s32.totalorder %s16, 2
      // Predicated region
      $region21: #{tpu_custom_call.1} parent=5 // pred_check
        %p154 = pneg %p153
      $region22: #{tpu_custom_call.1} parent=5 // pred_check_branch
        %156 = sbr.rel (%p154) target = $region24
      $region23: #{tpu_custom_call.1} parent=5 // pred_region
        // Predicated region
        $region25: #{tpu_custom_call.1} parent=23 // pred_check
          %p157 = pneg %p36
        $region26: #{tpu_custom_call.1} parent=23 // pred_check_branch
          %159 = sbr.rel (%p157) target = $region28
        $region27: #{tpu_custom_call.1} parent=23 // pred_region
          %s160 = sand.u32 %s26, 1
          %s161 = scalar_lea.sflag [#allocation3], %s160
          %s162 = sand.u32 %s26, 1
          %s163 = smul.addr %s162, 16
          %s164 = scalar_lea.vmem [#allocation2], %s163
          %s165 = smul.u32 2, %s16
          %167 = vsyncadd %s161, 0
          %s168 = smul.addr %s165, 8
          %s169 = scalar_lea.hbm %s0, %s168
          %s170 = sshll.u32 %s169, 4
          %s171 = int_to_ptr.hbm [resolvable:$true] %s170
          %s172 = sshll.u32 %s164, 4
          %s173 = int_to_ptr.vmem [resolvable:$true] %s172
          %178 = dma.hbm_to_vmem [thread:$0]  %s171, 256, %s173, %s161, 128, 128, 8
        $region28: #{tpu_custom_call.1} parent=23 // pred_fallthru
          _
      $region24: #{tpu_custom_call.1} parent=5 // pred_fallthru
        _
      %p179 = scmp.le.s32.totalorder 1, %s16
      %p180 = scmp.lt.s32.totalorder %s16, 3
      %p181 = pnand %p179, %p180
      %p182 = pneg %p181
      // Predicated region
      $region29: #{tpu_custom_call.1} parent=5 // pred_check
        _
      $region30: #{tpu_custom_call.1} parent=5 // pred_check_branch
        %184 = sbr.rel (%p181) target = $region32
      $region31: #{tpu_custom_call.1} parent=5 // pred_region
        %s185 = ssub.s32 %s16, 1
        %s186 = sand.u32 %s29, 1
        %s187 = scalar_lea.sflag [#allocation3], %s186
        %s188 = sand.u32 %s29, 1
        %s189 = smul.addr %s188, 16
        %s190 = scalar_lea.vmem [#allocation2], %s189
        // Predicated region
        $region33: #{tpu_custom_call.1} parent=31 // pred_check
          %p191 = pneg %p42
        $region34: #{tpu_custom_call.1} parent=31 // pred_check_branch
          %193 = sbr.rel (%p191) target = $region36
        $region35: #{tpu_custom_call.1} parent=31 // pred_region
          %195 = dma.done %s187, 256
        $region36: #{tpu_custom_call.1} parent=31 // pred_fallthru
          _
        // Predicated region
        $region37: #{tpu_custom_call.1} parent=31 // pred_check
          %p196 = pneg %p63
        $region38: #{tpu_custom_call.1} parent=31 // pred_check_branch
          %198 = sbr.rel (%p196) target = $region40
        $region39: #{tpu_custom_call.1} parent=31 // pred_region
          %200 = dma.done [#allocation6], 640
        $region40: #{tpu_custom_call.1} parent=31 // pred_fallthru
          _
        // Predicated region
        $region41: #{tpu_custom_call.1} parent=31 // pred_check
          %p201 = pneg %p84
        $region42: #{tpu_custom_call.1} parent=31 // pred_check_branch
          %203 = sbr.rel (%p201) target = $region44
        $region43: #{tpu_custom_call.1} parent=31 // pred_region
          %205 = dma.done [#allocation6], 512
        $region44: #{tpu_custom_call.1} parent=31 // pred_fallthru
          _
        %s206 = sand.u32 %s29, 1
        %s207 = scalar_lea.sflag [#allocation3], %s206
        %s208 = sand.u32 %s29, 1
        %s209 = smul.addr %s208, 16
        %s210 = scalar_lea.vmem [#allocation2], %s209
        %p211 = pneg %p42
        %p212 = pneg %p39
        %p213 = pneg %p63
        %p214 = pneg %p60
        %p215 = pneg %p84
        %p216 = pneg %p81
        %p217 = pneg %p110
        %p218 = pneg %p107
        %s219 = sand.u32 %s97, 1
        %s220 = scalar_lea.sflag [#allocation4], %s219
        %s221 = sand.u32 %s97, 1
        %s222 = smul.addr %s221, 8
        %s223 = scalar_lea.vmem [#allocation8], %s222
        %s224 = smul.u32 2, %s21
        %s225 = smul.u32 2, %s21
        %v226 = vld [vmem:[%s190] sm:$0xff]
        %v227 = vld [vmem:[%s190 + $0x8] sm:$0xff]
        %v228 = vld [vmem:[#allocation5] sm:$0xff]
        %v229 = vld [vmem:[#allocation5 + $0x8] sm:$0xff]
        %v230 = vld [vmem:[#allocation5 + $0x10] sm:$0xff]
        %v231 = vld [vmem:[#allocation5 + $0x18] sm:$0xff]
        %v232 = vld [vmem:[#allocation5 + $0x20] sm:$0x7f]
        %vm233 = vcmask 318464
        %v235 = vsel %vm233, %v226, 0
        %v238 = vsel %vm233, %v227, 0
        %vm240 = vcmask 1046528
        %v242 = vsel %vm240, %v232, 0
        %244 = vmatpush.msra.mxu0 0.0
        %245 = vmatpush.msra.mxu0 0.0
        %246 = vmatpush.msra.mxu0 0.0
        %247 = vmatpush.msra.mxu0 0.0
        %248 = vmatpush.msra.mxu0 0.0
        %249 = vmatpush.msra.mxu0 0.0
        %250 = vmatpush.msra.mxu0 0.0
        %251 = vmatpush.msra.mxu0 0.0
        %252 = vmatpush.msra.mxu0 0.0
        %253 = vmatpush.msra.mxu0 0.0
        %254 = vmatpush.msra.mxu0 0.0
        %255 = vmatpush.msra.mxu0 %v242
        %256 = vmatpush.msra.mxu0 %v231
        %257 = vmatpush.msra.mxu0 %v230
        %258 = vmatpush.msra.mxu0 %v229
        %259 = vmatpush.msra.mxu0 %v228
        %260 = vmatmul.f32.gmra.mxu0 %v235
        %v261 = vpop.f32.mrf.mxu0
        %v262 = vadd.f32 0.0, %v261
        %263 = vmatmul.f32.gmra.mxu0 %v238
        %v264 = vpop.f32.mrf.mxu0
        %v265 = vadd.f32 0.0, %v264
        %266 = vdwg.mxu0
        %267 = vset.pattern.permute.xlu0 0
        %268 = vperm.xlu0 %267, %v226
        %v269 = vpop.permute.xlu0 %268
        %271 = vset.pattern.permute.xlu0 0
        %272 = vperm.xlu0 %271, %v227
        %v273 = vpop.permute.xlu0 %272
        %v275 = vmul.f32 %v269, %v262
        %v276 = vmul.f32 %v273, %v265
        %277 = vset.pattern.permute.xlu0 1
        %278 = vperm.xlu0 %277, %v226
        %v279 = vpop.permute.xlu0 %278
        %281 = vset.pattern.permute.xlu0 1
        %282 = vperm.xlu0 %281, %v227
        %v283 = vpop.permute.xlu0 %282
        %v285 = vmul.f32 %v279, %v262
        %v286 = vmul.f32 %v283, %v265
        %289 = vrot.lane.b32.xlu0 %v285, 112
        %v290 = vpop.permute.xlu0 %289
        %291 = vrot.lane.b32.xlu0 %v286, 112
        %v292 = vpop.permute.xlu0 %291
        %v295 = vadd.f32 %v275, %v290
        %v296 = vadd.f32 %v276, %v292
        %297 = vset.pattern.permute.xlu0 2
        %298 = vperm.xlu0 %297, %v226
        %v299 = vpop.permute.xlu0 %298
        %301 = vset.pattern.permute.xlu0 2
        %302 = vperm.xlu0 %301, %v227
        %v303 = vpop.permute.xlu0 %302
        %v305 = vmul.f32 %v299, %v262
        %v306 = vmul.f32 %v303, %v265
        %309 = vrot.lane.b32.xlu0 %v305, 96
        %v310 = vpop.permute.xlu0 %309
        %311 = vrot.lane.b32.xlu0 %v306, 96
        %v312 = vpop.permute.xlu0 %311
        %v315 = vadd.f32 %v295, %v310
        %v316 = vadd.f32 %v296, %v312
        %v317 = vld [vmem:[#allocation7] sm:$0xff]
        %v318 = vld [vmem:[#allocation7 + $0x8] sm:$0xff]
        %v319 = vld [vmem:[#allocation7 + $0x10] sm:$0xff]
        %v320 = vld [vmem:[#allocation7 + $0x18] sm:$0xff]
        %vm321 = vcmask 130048
        %v323 = vsel %vm321, %v315, 0
        %v326 = vsel %vm321, %v316, 0
        %328 = vmatpush.msra.mxu0 0.0
        %329 = vmatpush.msra.mxu0 0.0
        %330 = vmatpush.msra.mxu0 0.0
        %331 = vmatpush.msra.mxu0 0.0
        %332 = vmatpush.msra.mxu0 0.0
        %333 = vmatpush.msra.mxu0 0.0
        %334 = vmatpush.msra.mxu0 0.0
        %335 = vmatpush.msra.mxu0 0.0
        %336 = vmatpush.msra.mxu0 0.0
        %337 = vmatpush.msra.mxu0 0.0
        %338 = vmatpush.msra.mxu0 0.0
        %339 = vmatpush.msra.mxu0 0.0
        %340 = vmatpush.msra.mxu0 0.0
        %341 = vmatpush.msra.mxu0 0.0
        %342 = vmatpush.msra.mxu0 %v320
        %343 = vmatpush.msra.mxu0 %v319
        %344 = vmatmul.f32.gmra.mxu0 %v323
        %v345 = vpop.f32.mrf.mxu0
        %v346 = vadd.f32 0.0, %v345
        %347 = vmatmul.f32.gmra.mxu0 %v326
        %v348 = vpop.f32.mrf.mxu0
        %v349 = vadd.f32 0.0, %v348
        %350 = vdwg.mxu0
        %353 = vrot.lane.b32.xlu0 %v262, 80
        %v354 = vpop.permute.xlu0 %353
        %355 = vrot.lane.b32.xlu0 %v265, 80
        %v356 = vpop.permute.xlu0 %355
        %v357 = vsel %vm321, %v354, 0
        %v359 = vsel %vm321, %v356, 0
        %361 = vmatpush.msra.mxu0 0.0
        %362 = vmatpush.msra.mxu0 0.0
        %363 = vmatpush.msra.mxu0 0.0
        %364 = vmatpush.msra.mxu0 0.0
        %365 = vmatpush.msra.mxu0 0.0
        %366 = vmatpush.msra.mxu0 0.0
        %367 = vmatpush.msra.mxu0 0.0
        %368 = vmatpush.msra.mxu0 0.0
        %369 = vmatpush.msra.mxu0 0.0
        %370 = vmatpush.msra.mxu0 0.0
        %371 = vmatpush.msra.mxu0 0.0
        %372 = vmatpush.msra.mxu0 0.0
        %373 = vmatpush.msra.mxu0 0.0
        %374 = vmatpush.msra.mxu0 0.0
        %375 = vmatpush.msra.mxu0 %v318
        %376 = vmatpush.msra.mxu0 %v317
        %377 = vmatmul.f32.gmra.mxu0 %v357
        %v378 = vpop.f32.mrf.mxu0
        %v379 = vadd.f32 %v346, %v378
        %380 = vmatmul.f32.gmra.mxu0 %v359
        %v381 = vpop.f32.mrf.mxu0
        %v382 = vadd.f32 %v349, %v381
        %383 = vdwg.mxu0
        %v384 = vpack.c.bf16 %v379, %v379
        %v385 = vpack.c.bf16 %v382, %v382
        %vm386 = vcmask 257024
        %387 = vst.msk [vmem:[%s223] sm:$0xf] %vm386, %v384
        %388 = vst.msk [vmem:[%s223 + $0x4] sm:$0xf] %vm386, %v385
        %s389 = sand.u32 %s97, 1
        %s390 = scalar_lea.sflag [#allocation4], %s389
        %s391 = sand.u32 %s97, 1
        %s392 = smul.addr %s391, 8
        %s393 = scalar_lea.vmem [#allocation8], %s392
        // Predicated region
        $region45: #{tpu_custom_call.1} parent=31 // pred_check
          %p394 = pneg %p107
        $region46: #{tpu_custom_call.1} parent=31 // pred_check_branch
          %396 = sbr.rel (%p394) target = $region48
        $region47: #{tpu_custom_call.1} parent=31 // pred_region
          %s397 = smul.u32 2, %s21
          %399 = vsyncadd %s390, 0
          %s400 = smul.addr %s397, 4
          %s401 = scalar_lea.hbm %s3, %s400
          %s402 = sshll.u32 %s393, 4
          %s403 = int_to_ptr.vmem [resolvable:$true] %s402
          %s404 = sshll.u32 %s401, 4
          %s405 = int_to_ptr.hbm [resolvable:$true] %s404
          %410 = dma.vmem_to_hbm [thread:$0]  %s403, 128, %s405, %s390, 64, 64, 4
        $region48: #{tpu_custom_call.1} parent=31 // pred_fallthru
          _
      $region32: #{tpu_custom_call.1} parent=5 // pred_fallthru
        _
      %p411 = scmp.le.s32.totalorder 2, %s16
      // Predicated region
      $region49: #{tpu_custom_call.1} parent=5 // pred_check
        %p412 = pneg %p411
      $region50: #{tpu_custom_call.1} parent=5 // pred_check_branch
        %414 = sbr.rel (%p412) target = $region52
      $region51: #{tpu_custom_call.1} parent=5 // pred_region
        %s415 = ssub.s32 %s16, 2
        // Predicated region
        $region53: #{tpu_custom_call.1} parent=51 // pred_check
          %p416 = pneg %p113
        $region54: #{tpu_custom_call.1} parent=51 // pred_check_branch
          %418 = sbr.rel (%p416) target = $region56
        $region55: #{tpu_custom_call.1} parent=51 // pred_region
          %s419 = sand.u32 %s98, 1
          %s420 = scalar_lea.sflag [#allocation4], %s419
          %s421 = sand.u32 %s98, 1
          %s422 = smul.addr %s421, 8
          %s423 = scalar_lea.vmem [#allocation8], %s422
          %425 = dma.done %s420, 128
        $region56: #{tpu_custom_call.1} parent=51 // pred_fallthru
          _
      $region52: #{tpu_custom_call.1} parent=5 // pred_fallthru
        _
    $region6: #{tpu_custom_call.1} parent=1 // loop_footer
      %s20 = sadd.s32 1, %s16
    $region7: #{tpu_custom_call.1} parent=1 // loop_footer_branch
      %15 = sbr.rel target = $region3
    $region8: #{tpu_custom_call.1} parent=1 // loop_exit
      _
    %426 = vsyncpa [#allocation3], 1
    %s427 = scalar_lea.sflag [#allocation3], 1
    %428 = vsyncpa %s427, 1
    %429 = vsyncpa [#allocation6], 1
    %430 = vsyncpa [#allocation4], 1
    %s431 = scalar_lea.sflag [#allocation4], 1
    %432 = vsyncpa %s431, 1

</llo_original>
